<compile_context>
chip_gen: v7x
topology: tpu7x:2x2x1
jax: 0.10.0
libtpu: 0.0.40
codegen_flags: <defaults>
</compile_context>

<pallas_src>
import functools
import math

import jax
import jax.numpy as jnp
from jax.experimental import pallas as pl
from jax.experimental.pallas import tpu as pltpu


def _output_scaler_kernel(x_ref, scale_ref, bias_ref, o_ref, *, compute_dtype):
    # Pure elementwise hot path: mul/add on the VPU, tanh on the EUP.
    # scale/bias arrive pre-cast to compute_dtype (hoisted to the wrapper) as
    # (1, W) rows and broadcast over the sublane (row) axis.
    x = x_ref[...].astype(compute_dtype)
    y = jnp.tanh(x * scale_ref[...] + bias_ref[...])
    o_ref[...] = y.astype(o_ref.dtype)


def _lcm(a, b):
    return a * b // math.gcd(a, b)


def _cdiv(a, b):
    return -(-a // b)


def _round_up(x, m):
    return ((x + m - 1) // m) * m


def _vmem_budget_bytes():
    # Per-call VMEM budget derived from the chip (v5e/v6e: 128 MiB physical,
    # v7x: 64 MiB per TC).  ~1/3 of physical keeps the double-buffered
    # in+out working set comfortably inside the scoped limit everywhere.
    try:
        cap = int(pltpu.get_tpu_info().vmem_capacity_bytes)
    except Exception:  # non-TPU backend / old runtime: be conservative.
        cap = 64 * 1024 * 1024
    budget = min(cap // 3, 48 * 1024 * 1024)
    return cap, budget


def _pallas_2d(x2d, scale2d, bias2d, out_dtype, compute_dtype, row_tile):
    """tanh(x2d * scale2d + bias2d) for x2d:(R, W), scale2d/bias2d:(1, W)."""
    R, W = int(x2d.shape[0]), int(x2d.shape[1])
    in_item = jnp.dtype(x2d.dtype).itemsize
    out_item = jnp.dtype(out_dtype).itemsize
    sub = max(8, 32 // min(in_item, out_item))  # sublane-pack multiple

    cap, budget = _vmem_budget_bytes()
    per_row = 2 * W * (in_item + out_item)  # double-buffered input + output
    if row_tile is None:
        row_tile = max(sub, (budget // per_row) // sub * sub)
    else:
        row_tile = max(sub, (int(row_tile) // sub) * sub)
    row_tile = min(row_tile, _round_up(R, sub))

    # v7x megacore: ensure the "parallel" grid has >= 2 steps so both
    # TensorCores get work (one extra ~0.35us step elsewhere: negligible).
    if _cdiv(R, row_tile) < 2:
        half = _round_up(_cdiv(R, 2), sub)
        if sub <= half < row_tile:
            row_tile = half
    grid = (_cdiv(R, row_tile),)

    # Working set: double-buffered x + out tiles plus resident scale/bias.
    comp_item = jnp.dtype(compute_dtype).itemsize
    working = row_tile * per_row + 4 * W * comp_item
    vmem_limit = int(min(cap, max(budget, working) + (4 << 20)))

    total = R * W
    cost = pl.CostEstimate(
        flops=2 * total,
        transcendentals=total,
        bytes_accessed=total * (in_item + out_item),
    )

    kernel = functools.partial(_output_scaler_kernel, compute_dtype=compute_dtype)
    # TODO(synk): could add pipeline_mode=pl.Buffered(3) on the x spec when
    # row_tile gets very small, but with the chip-derived budget the per-step
    # DMA is already large enough to stay latency-hidden at depth 2.
    return pl.pallas_call(
        kernel,
        out_shape=jax.ShapeDtypeStruct((R, W), out_dtype),
        grid_spec=pltpu.PrefetchScalarGridSpec(
            num_scalar_prefetch=0,
            grid=grid,
            in_specs=[
                pl.BlockSpec((row_tile, W), lambda i: (i, 0)),
                pl.BlockSpec((1, W), lambda i: (0, 0)),  # resident scale
                pl.BlockSpec((1, W), lambda i: (0, 0)),  # resident bias
            ],
            out_specs=pl.BlockSpec((row_tile, W), lambda i: (i, 0)),
        ),
        compiler_params=pltpu.CompilerParams(
            dimension_semantics=("parallel",),
            vmem_limit_bytes=vmem_limit,
        ),
        cost_estimate=cost,
    )(x2d, scale2d, bias2d)


def output_scaler(x, scale, bias, *, row_tile=None, force_pallas=False):
    """y = tanh(x * scale + bias), broadcasting scale/bias over the last dim.

    x: (..., D),  scale: (D,),  bias: (D,)
    """
    orig_shape = x.shape
    D = int(orig_shape[-1])
    out_dtype = jnp.result_type(x.dtype, scale.dtype, bias.dtype)
    total = int(x.size)

    if total == 0:
        return jnp.zeros(orig_shape, out_dtype)

    # Tiny inputs: kernel launch overhead dominates, let XLA fuse it.
    if not force_pallas and total < (1 << 16):
        return jnp.tanh(
            x.astype(out_dtype) * scale.astype(out_dtype) + bias.astype(out_dtype)
        ).astype(out_dtype)

    # Compute dtype: bf16 only when everything is bf16 (matches a bf16 torch
    # module; avoids the f32 up/down-cast VALU work on v6e/v7x), else f32.
    all_bf16 = (
        x.dtype == jnp.bfloat16
        and scale.dtype == jnp.bfloat16
        and bias.dtype == jnp.bfloat16
    )
    compute_dtype = jnp.bfloat16 if all_bf16 else jnp.float32

    scale_row = scale.reshape(1, D).astype(compute_dtype)
    bias_row = bias.reshape(1, D).astype(compute_dtype)

    if D % 128 == 0 or D >= 64:
        # Copy-free path: collapse leading dims only (free), feed (R, D)
        # directly.  Last block dim == full array dim is legal even when
        # D % 128 != 0 (masked stores on the tail lanes); the ragged last
        # row-block is masked by the grid.  No pad, no output slicing.
        R = total // D
        x2d = x.reshape(R, D)
        out2d = _pallas_2d(x2d, scale_row, bias_row, out_dtype, compute_dtype, row_tile)
        return out2d.reshape(orig_shape)

    # Small awkward D (< 64, not a multiple of 128): lane-dense repack.
    # W is a multiple of lcm(D, 128) (<= 8064 here -> no VMEM blow-up) so the
    # period-D broadcast of scale/bias is preserved; only a tiny tail pad.
    base = _lcm(D, 128)
    W = base * max(1, 2048 // base)
    in_item = jnp.dtype(x.dtype).itemsize
    out_item = jnp.dtype(out_dtype).itemsize
    sub = max(8, 32 // min(in_item, out_item))
    rows = _round_up(_cdiv(total, W), sub)
    flat = x.reshape(-1)
    pad = rows * W - total
    if pad:
        flat = jnp.pad(flat, (0, pad))  # tail computes tanh(bias); sliced off
    x2d = flat.reshape(rows, W)
    reps = W // D
    out2d = _pallas_2d(
        x2d,
        jnp.tile(scale_row, (1, reps)),
        jnp.tile(bias_row, (1, reps)),
        out_dtype,
        compute_dtype,
        row_tile,
    )
    return out2d.reshape(-1)[:total].reshape(orig_shape)


def _reference(x, scale, bias):
    out_dtype = jnp.result_type(x.dtype, scale.dtype, bias.dtype)
    return jnp.tanh(
        x.astype(out_dtype) * scale.astype(out_dtype) + bias.astype(out_dtype)
    ).astype(out_dtype)


if __name__ == "__main__":
    key = jax.random.PRNGKey(0)
    kx, ks, kb, kx2, kx3, kx4, kx5, ks5, kb5 = jax.random.split(key, 9)

    # ---- Test 1: small module-like shape, D=32 -> lane-dense repack path ---
    batch, seq, input_dim = 2, 8, 32
    x = jax.random.normal(kx, (batch, seq, input_dim), dtype=jnp.float32)
    scale = 1.0 + 0.1 * jax.random.normal(ks, (input_dim,), dtype=jnp.float32)
    bias = 0.1 * jax.random.normal(kb, (input_dim,), dtype=jnp.float32)
    y = jax.block_until_ready(output_scaler(x, scale, bias, force_pallas=True))
    y_ref = _reference(x, scale, bias)
    assert y.shape == x.shape and y.dtype == y_ref.dtype
    assert jnp.allclose(y, y_ref, atol=1e-6, rtol=1e-6)

    # ---- Test 2: D=96 (>=64, not mult of 128) -> copy-free masked-store path
    #      with a ragged last row-block (1640 rows, row_tile=64) -------------
    x2 = jax.random.normal(kx2, (8, 205, 96), dtype=jnp.float32)
    scale2 = 1.0 + 0.05 * jax.random.normal(ks, (96,), dtype=jnp.float32)
    bias2 = 0.05 * jax.random.normal(kb, (96,), dtype=jnp.float32)
    y2 = jax.block_until_ready(
        output_scaler(x2, scale2, bias2, row_tile=64, force_pallas=True)
    )
    assert y2.shape == x2.shape
    assert jnp.allclose(y2, _reference(x2, scale2, bias2), atol=1e-6, rtol=1e-6)

    # ---- Test 3: D=128 -> fully dense copy-free path, auto tiling, 2-step
    #      grid (v7x megacore split branch) ----------------------------------
    x3 = jax.random.normal(kx3, (4, 16, 128), dtype=jnp.float32)
    scale3 = 1.0 + 0.05 * jax.random.normal(ks, (128,), dtype=jnp.float32)
    bias3 = 0.05 * jax.random.normal(kb, (128,), dtype=jnp.float32)
    y3 = jax.block_until_ready(output_scaler(x3, scale3, bias3, force_pallas=True))
    assert jnp.allclose(y3, _reference(x3, scale3, bias3), atol=1e-6, rtol=1e-6)

    # ---- Test 4: bf16 storage, f32 params -> f32 compute, f32 output -------
    x4 = jax.random.normal(kx4, (4, 64, 32), dtype=jnp.bfloat16)
    y4 = jax.block_until_ready(output_scaler(x4, scale, bias, force_pallas=True))
    y4_ref = _reference(x4, scale, bias)
    assert y4.dtype == y4_ref.dtype
    assert jnp.allclose(y4, y4_ref, atol=1e-5, rtol=1e-5)

    # ---- Test 5: all-bf16 (D=256) -> bf16 compute, dense copy-free path ----
    x5 = jax.random.normal(kx5, (2, 32, 256), dtype=jnp.bfloat16)
    scale5 = (1.0 + 0.05 * jax.random.normal(ks5, (256,), jnp.float32)).astype(jnp.bfloat16)
    bias5 = (0.05 * jax.random.normal(kb5, (256,), jnp.float32)).astype(jnp.bfloat16)
    y5 = jax.block_until_ready(output_scaler(x5, scale5, bias5, force_pallas=True))
    y5_ref = _reference(x5, scale5, bias5)
    assert y5.dtype == y5_ref.dtype == jnp.bfloat16
    assert jnp.allclose(
        y5.astype(jnp.float32), y5_ref.astype(jnp.float32), atol=2e-2, rtol=2e-2
    )

    # ---- Test 6: module default input_dim=1 -> repack path with scalar
    #      scale/bias ---------------------------------------------------------
    x6 = jax.random.normal(kx, (4, 8, 1), dtype=jnp.float32)
    scale6 = jnp.ones((1,), jnp.float32) * 1.3
    bias6 = jnp.ones((1,), jnp.float32) * 0.2
    y6 = jax.block_until_ready(output_scaler(x6, scale6, bias6, force_pallas=True))
    assert jnp.allclose(y6, _reference(x6, scale6, bias6), atol=1e-6, rtol=1e-6)

    print("KERNEL_OK")
</pallas_src>

<mosaic_0001>
module attributes {stable_mosaic.version = 11 : i64} {
  func.func @_output_scaler_kernel(%arg0: i32, %arg1: memref<8x2048xf32, #tpu.memory_space<vmem>>, %arg2: memref<1x2048xf32, #tpu.memory_space<vmem>>, %arg3: memref<1x2048xf32, #tpu.memory_space<vmem>>, %arg4: memref<8x2048xf32, #tpu.memory_space<vmem>>) attributes {dimension_semantics = [#tpu.dimension_semantics<parallel>], iteration_bounds = array<i64: 1>, scalar_prefetch = 0 : i64, scratch_operands = 0 : i64, tpu.core_type = #tpu.core_type<tc>, window_params = [{transform_indices = @transform_0, window_bounds = array<i64: 8, 2048>}, {pipeline_mode = #tpu.pipeline_mode<synchronous>, transform_indices = @transform_1, window_bounds = array<i64: 1, 2048>}, {pipeline_mode = #tpu.pipeline_mode<synchronous>, transform_indices = @transform_2, window_bounds = array<i64: 1, 2048>}, {transform_indices = @transform_3, window_bounds = array<i64: 8, 2048>}]} {
    %c0 = arith.constant 0 : index
    %c0_0 = arith.constant 0 : index
    %0 = vector.load %arg1[%c0, %c0_0] : memref<8x2048xf32, #tpu.memory_space<vmem>>, vector<8x2048xf32>
    %c0_1 = arith.constant 0 : index
    %c0_2 = arith.constant 0 : index
    %1 = vector.load %arg2[%c0_1, %c0_2] : memref<1x2048xf32, #tpu.memory_space<vmem>>, vector<1x2048xf32>
    %2 = vector.broadcast %1 : vector<1x2048xf32> to vector<8x2048xf32>
    %3 = arith.mulf %0, %2 : vector<8x2048xf32>
    %c0_3 = arith.constant 0 : index
    %c0_4 = arith.constant 0 : index
    %4 = vector.load %arg3[%c0_3, %c0_4] : memref<1x2048xf32, #tpu.memory_space<vmem>>, vector<1x2048xf32>
    %5 = vector.broadcast %4 : vector<1x2048xf32> to vector<8x2048xf32>
    %6 = arith.addf %3, %5 : vector<8x2048xf32>
    %7 = math.tanh %6 : vector<8x2048xf32>
    %c0_5 = arith.constant 0 : index
    %c0_6 = arith.constant 0 : index
    %8 = vector.load %arg4[%c0_5, %c0_6] : memref<8x2048xf32, #tpu.memory_space<vmem>>, vector<8x2048xf32>
    tpu.vector_store %arg4[%c0_5, %c0_6], %7 {strides = array<i32>} : memref<8x2048xf32, #tpu.memory_space<vmem>>, vector<8x2048xf32>,
    return
  }
  func.func @transform_0(%arg0: i32) -> (i32, i32) {
    %c0_i32 = arith.constant 0 : i32
    %c0_i32_0 = arith.constant 0 : i32
    return %arg0, %c0_i32 : i32, i32
  }
  func.func @transform_1(%arg0: i32) -> (i32, i32) {
    %c0_i32 = arith.constant 0 : i32
    %c0_i32_0 = arith.constant 0 : i32
    %c0_i32_1 = arith.constant 0 : i32
    return %c0_i32, %c0_i32_0 : i32, i32
  }
  func.func @transform_2(%arg0: i32) -> (i32, i32) {
    %c0_i32 = arith.constant 0 : i32
    %c0_i32_0 = arith.constant 0 : i32
    %c0_i32_1 = arith.constant 0 : i32
    return %c0_i32, %c0_i32_0 : i32, i32
  }
  func.func @transform_3(%arg0: i32) -> (i32, i32) {
    %c0_i32 = arith.constant 0 : i32
    %c0_i32_0 = arith.constant 0 : i32
    return %arg0, %c0_i32 : i32, i32
  }
}

</mosaic_0001>

<llo_original>
// kernel: tpu_custom_call.1
$region0: #{tpu_custom_call.1}
  #allocation0 [shape = 'u32[]', space=smem, size = 0x4, offset = 0x4, fixed_abs, tag = 'smem constant byte address 0x4 - core index']
  #allocation1 [shape = 'u32[144,128]{1,0:T(1,128)}', space=vmem, size = 0x12000, scoped, tag = 'internal scratch']
  %s0 = inlined_call_operand.hbm [shape: f32[8,2048], index: 0, kind: input, shape index: {}]
  %s1 = inlined_call_operand.hbm [shape: f32[1,2048], index: 1, kind: input, shape index: {}]
  %s2 = inlined_call_operand.hbm [shape: f32[1,2048], index: 2, kind: input, shape index: {}]
  %s3 = inlined_call_operand.hbm [shape: f32[8,2048], index: 3, kind: output, shape index: {}]
  %s4 = sld [smem:[#allocation0]]
  $region34: #{tpu_custom_call.1} parent=0
    _
  %s6 = ssub.s32 1, %s4
  %s7 = scalar_select 0, %s6, %s4
  $region1: #{tpu_custom_call.1} parent=0
    #allocation2 [shape = 'u8[65536]{0}', space=vmem, size = 0x10000, scoped, tag = 'input window, operand 0, single buffered']
    #allocation3 [shape = 's32[1]{0}', space=sflag, size = 0x4, scoped, tag = 'scoped memory for tpu_custom_call.1']
    #allocation4 [shape = 's32[1]{0}', space=sflag, size = 0x4, scoped, tag = 'scoped memory for tpu_custom_call.1']
    #allocation5 [shape = 'u8[8192]{0}', space=vmem, size = 0x2000, scoped, tag = 'input window, operand 1, single buffered']
    #allocation6 [shape = 's32[1]{0}', space=sflag, size = 0x4, scoped, tag = 'scoped memory for tpu_custom_call.1']
    #allocation7 [shape = 'u8[8192]{0}', space=vmem, size = 0x2000, scoped, tag = 'input window, operand 2, single buffered']
    #allocation8 [shape = 'u8[65536]{0}', space=vmem, size = 0x10000, scoped, tag = 'output window, operand 0, single buffered']
    %8 = vsyncpa [#allocation3], 0
    %9 = vsyncpa [#allocation6], 0
    %10 = vsyncpa [#allocation4], 0
    // Predicated region
    $region2: #{tpu_custom_call.1} parent=1 // pred_check
      _
    $region3: #{tpu_custom_call.1} parent=1 // pred_check_branch
      %12 = sbr.rel (0) target = $region5
    $region4: #{tpu_custom_call.1} parent=1 // pred_region
      %s14 = ssub.s32 2048, 2048
      %15 = vsyncadd [#allocation3], %s14
      %s17 = sshll.u32 [#allocation2], 4
      %s18 = int_to_ptr.vmem [resolvable:$true] %s17
      %20 = dma.hbm_to_vmem [thread:$0]  %s0, 2048, %s18, [#allocation3]
    $region5: #{tpu_custom_call.1} parent=1 // pred_fallthru
      _
    // Predicated region
    $region6: #{tpu_custom_call.1} parent=1 // pred_check
      _
    $region7: #{tpu_custom_call.1} parent=1 // pred_check_branch
      %22 = sbr.rel (0) target = $region9
    $region8: #{tpu_custom_call.1} parent=1 // pred_region
      %s24 = ssub.s32 256, 256
      %25 = vsyncadd [#allocation6], %s24
      %s27 = sshll.u32 [#allocation5], 4
      %s28 = int_to_ptr.vmem [resolvable:$true] %s27
      %30 = dma.hbm_to_vmem [thread:$0]  %s1, 256, %s28, [#allocation6]
    $region9: #{tpu_custom_call.1} parent=1 // pred_fallthru
      _
    // Predicated region
    $region10: #{tpu_custom_call.1} parent=1 // pred_check
      _
    $region11: #{tpu_custom_call.1} parent=1 // pred_check_branch
      %32 = sbr.rel (0) target = $region13
    $region12: #{tpu_custom_call.1} parent=1 // pred_region
      %s34 = ssub.s32 256, 256
      %35 = vsyncadd [#allocation6], %s34
      %s37 = sshll.u32 [#allocation7], 4
      %s38 = int_to_ptr.vmem [resolvable:$true] %s37
      %40 = dma.hbm_to_vmem [thread:$0]  %s2, 256, %s38, [#allocation6]
    $region13: #{tpu_custom_call.1} parent=1 // pred_fallthru
      _
    // Predicated region
    $region14: #{tpu_custom_call.1} parent=1 // pred_check
      _
    $region15: #{tpu_custom_call.1} parent=1 // pred_check_branch
      %42 = sbr.rel (0) target = $region17
    $region16: #{tpu_custom_call.1} parent=1 // pred_region
      %43 = dma.done [#allocation3], 2048
    $region17: #{tpu_custom_call.1} parent=1 // pred_fallthru
      _
    // Predicated region
    $region18: #{tpu_custom_call.1} parent=1 // pred_check
      _
    $region19: #{tpu_custom_call.1} parent=1 // pred_check_branch
      %45 = sbr.rel (0) target = $region21
    $region20: #{tpu_custom_call.1} parent=1 // pred_region
      %46 = dma.done [#allocation6], 256
    $region21: #{tpu_custom_call.1} parent=1 // pred_fallthru
      _
    // Predicated region
    $region22: #{tpu_custom_call.1} parent=1 // pred_check
      _
    $region23: #{tpu_custom_call.1} parent=1 // pred_check_branch
      %48 = sbr.rel (0) target = $region25
    $region24: #{tpu_custom_call.1} parent=1 // pred_region
      %49 = dma.done [#allocation6], 256
    $region25: #{tpu_custom_call.1} parent=1 // pred_fallthru
      _
    %v50 = vld [vmem:[#allocation2] sm:$0xff]
    %v51 = vld [vmem:[#allocation2 + $0x8] sm:$0xff]
    %v52 = vld [vmem:[#allocation2 + $0x10] sm:$0xff]
    %v53 = vld [vmem:[#allocation2 + $0x18] sm:$0xff]
    %v54 = vld [vmem:[#allocation2 + $0x20] sm:$0xff]
    %v55 = vld [vmem:[#allocation2 + $0x28] sm:$0xff]
    %v56 = vld [vmem:[#allocation2 + $0x30] sm:$0xff]
    %v57 = vld [vmem:[#allocation2 + $0x38] sm:$0xff]
    %v58 = vld [vmem:[#allocation2 + $0x40] sm:$0xff]
    %v59 = vld [vmem:[#allocation2 + $0x48] sm:$0xff]
    %v60 = vld [vmem:[#allocation2 + $0x50] sm:$0xff]
    %v61 = vld [vmem:[#allocation2 + $0x58] sm:$0xff]
    %v62 = vld [vmem:[#allocation2 + $0x60] sm:$0xff]
    %v63 = vld [vmem:[#allocation2 + $0x68] sm:$0xff]
    %v64 = vld [vmem:[#allocation2 + $0x70] sm:$0xff]
    %v65 = vld [vmem:[#allocation2 + $0x78] sm:$0xff]
    %v66 = vld [vmem:[#allocation5] sm:$0xff]
    %v67 = vld [vmem:[#allocation5 + $0x8] sm:$0xff]
    %v70 = vlaneseq
    %v71 = vshrl.u32 %v70, 7
    %v72 = vsub.s32 0, %v71
    %v73 = vrot.slane %v66, %v72
    %v74 = vlaneseq
    %v75 = vshrl.u32 %v74, 7
    %v76 = vsub.s32 1, %v75
    %v77 = vrot.slane %v66, %v76
    %v78 = vlaneseq
    %v79 = vshrl.u32 %v78, 7
    %v80 = vsub.s32 2, %v79
    %v81 = vrot.slane %v66, %v80
    %v82 = vlaneseq
    %v83 = vshrl.u32 %v82, 7
    %v84 = vsub.s32 3, %v83
    %v85 = vrot.slane %v66, %v84
    %v86 = vlaneseq
    %v87 = vshrl.u32 %v86, 7
    %v88 = vsub.s32 4, %v87
    %v89 = vrot.slane %v66, %v88
    %v90 = vlaneseq
    %v91 = vshrl.u32 %v90, 7
    %v92 = vsub.s32 5, %v91
    %v93 = vrot.slane %v66, %v92
    %v94 = vlaneseq
    %v95 = vshrl.u32 %v94, 7
    %v96 = vsub.s32 6, %v95
    %v97 = vrot.slane %v66, %v96
    %v98 = vlaneseq
    %v99 = vshrl.u32 %v98, 7
    %v100 = vsub.s32 7, %v99
    %v101 = vrot.slane %v66, %v100
    %v102 = vlaneseq
    %v103 = vshrl.u32 %v102, 7
    %v104 = vsub.s32 0, %v103
    %v105 = vrot.slane %v67, %v104
    %v106 = vlaneseq
    %v107 = vshrl.u32 %v106, 7
    %v108 = vsub.s32 1, %v107
    %v109 = vrot.slane %v67, %v108
    %v110 = vlaneseq
    %v111 = vshrl.u32 %v110, 7
    %v112 = vsub.s32 2, %v111
    %v113 = vrot.slane %v67, %v112
    %v114 = vlaneseq
    %v115 = vshrl.u32 %v114, 7
    %v116 = vsub.s32 3, %v115
    %v117 = vrot.slane %v67, %v116
    %v118 = vlaneseq
    %v119 = vshrl.u32 %v118, 7
    %v120 = vsub.s32 4, %v119
    %v121 = vrot.slane %v67, %v120
    %v122 = vlaneseq
    %v123 = vshrl.u32 %v122, 7
    %v124 = vsub.s32 5, %v123
    %v125 = vrot.slane %v67, %v124
    %v126 = vlaneseq
    %v127 = vshrl.u32 %v126, 7
    %v128 = vsub.s32 6, %v127
    %v129 = vrot.slane %v67, %v128
    %v130 = vlaneseq
    %v131 = vshrl.u32 %v130, 7
    %v132 = vsub.s32 7, %v131
    %v133 = vrot.slane %v67, %v132
    %v150 = vmul.f32 %v50, %v73
    %v151 = vmul.f32 %v51, %v77
    %v152 = vmul.f32 %v52, %v81
    %v153 = vmul.f32 %v53, %v85
    %v154 = vmul.f32 %v54, %v89
    %v155 = vmul.f32 %v55, %v93
    %v156 = vmul.f32 %v56, %v97
    %v157 = vmul.f32 %v57, %v101
    %v158 = vmul.f32 %v58, %v105
    %v159 = vmul.f32 %v59, %v109
    %v160 = vmul.f32 %v60, %v113
    %v161 = vmul.f32 %v61, %v117
    %v162 = vmul.f32 %v62, %v121
    %v163 = vmul.f32 %v63, %v125
    %v164 = vmul.f32 %v64, %v129
    %v165 = vmul.f32 %v65, %v133
    %v166 = vld [vmem:[#allocation7] sm:$0xff]
    %v167 = vld [vmem:[#allocation7 + $0x8] sm:$0xff]
    %v170 = vlaneseq
    %v171 = vshrl.u32 %v170, 7
    %v172 = vsub.s32 0, %v171
    %v173 = vrot.slane %v166, %v172
    %v174 = vlaneseq
    %v175 = vshrl.u32 %v174, 7
    %v176 = vsub.s32 1, %v175
    %v177 = vrot.slane %v166, %v176
    %v178 = vlaneseq
    %v179 = vshrl.u32 %v178, 7
    %v180 = vsub.s32 2, %v179
    %v181 = vrot.slane %v166, %v180
    %v182 = vlaneseq
    %v183 = vshrl.u32 %v182, 7
    %v184 = vsub.s32 3, %v183
    %v185 = vrot.slane %v166, %v184
    %v186 = vlaneseq
    %v187 = vshrl.u32 %v186, 7
    %v188 = vsub.s32 4, %v187
    %v189 = vrot.slane %v166, %v188
    %v190 = vlaneseq
    %v191 = vshrl.u32 %v190, 7
    %v192 = vsub.s32 5, %v191
    %v193 = vrot.slane %v166, %v192
    %v194 = vlaneseq
    %v195 = vshrl.u32 %v194, 7
    %v196 = vsub.s32 6, %v195
    %v197 = vrot.slane %v166, %v196
    %v198 = vlaneseq
    %v199 = vshrl.u32 %v198, 7
    %v200 = vsub.s32 7, %v199
    %v201 = vrot.slane %v166, %v200
    %v202 = vlaneseq
    %v203 = vshrl.u32 %v202, 7
    %v204 = vsub.s32 0, %v203
    %v205 = vrot.slane %v167, %v204
    %v206 = vlaneseq
    %v207 = vshrl.u32 %v206, 7
    %v208 = vsub.s32 1, %v207
    %v209 = vrot.slane %v167, %v208
    %v210 = vlaneseq
    %v211 = vshrl.u32 %v210, 7
    %v212 = vsub.s32 2, %v211
    %v213 = vrot.slane %v167, %v212
    %v214 = vlaneseq
    %v215 = vshrl.u32 %v214, 7
    %v216 = vsub.s32 3, %v215
    %v217 = vrot.slane %v167, %v216
    %v218 = vlaneseq
    %v219 = vshrl.u32 %v218, 7
    %v220 = vsub.s32 4, %v219
    %v221 = vrot.slane %v167, %v220
    %v222 = vlaneseq
    %v223 = vshrl.u32 %v222, 7
    %v224 = vsub.s32 5, %v223
    %v225 = vrot.slane %v167, %v224
    %v226 = vlaneseq
    %v227 = vshrl.u32 %v226, 7
    %v228 = vsub.s32 6, %v227
    %v229 = vrot.slane %v167, %v228
    %v230 = vlaneseq
    %v231 = vshrl.u32 %v230, 7
    %v232 = vsub.s32 7, %v231
    %v233 = vrot.slane %v167, %v232
    %v250 = vadd.f32 %v150, %v173
    %v251 = vadd.f32 %v151, %v177
    %v252 = vadd.f32 %v152, %v181
    %v253 = vadd.f32 %v153, %v185
    %v254 = vadd.f32 %v154, %v189
    %v255 = vadd.f32 %v155, %v193
    %v256 = vadd.f32 %v156, %v197
    %v257 = vadd.f32 %v157, %v201
    %v258 = vadd.f32 %v158, %v205
    %v259 = vadd.f32 %v159, %v209
    %v260 = vadd.f32 %v160, %v213
    %v261 = vadd.f32 %v161, %v217
    %v262 = vadd.f32 %v162, %v221
    %v263 = vadd.f32 %v163, %v225
    %v264 = vadd.f32 %v164, %v229
    %v265 = vadd.f32 %v165, %v233
    %v266 = vtanh.pop %v250
    %v267 = vtanh.pop %v251
    %v268 = vtanh.pop %v252
    %v269 = vtanh.pop %v253
    %v270 = vtanh.pop %v254
    %v271 = vtanh.pop %v255
    %v272 = vtanh.pop %v256
    %v273 = vtanh.pop %v257
    %v274 = vtanh.pop %v258
    %v275 = vtanh.pop %v259
    %v276 = vtanh.pop %v260
    %v277 = vtanh.pop %v261
    %v278 = vtanh.pop %v262
    %v279 = vtanh.pop %v263
    %v280 = vtanh.pop %v264
    %v281 = vtanh.pop %v265
    %282 = vst [vmem:[#allocation8] sm:$0xff] %v266
    %283 = vst [vmem:[#allocation8 + $0x8] sm:$0xff] %v267
    %284 = vst [vmem:[#allocation8 + $0x10] sm:$0xff] %v268
    %285 = vst [vmem:[#allocation8 + $0x18] sm:$0xff] %v269
    %286 = vst [vmem:[#allocation8 + $0x20] sm:$0xff] %v270
    %287 = vst [vmem:[#allocation8 + $0x28] sm:$0xff] %v271
    %288 = vst [vmem:[#allocation8 + $0x30] sm:$0xff] %v272
    %289 = vst [vmem:[#allocation8 + $0x38] sm:$0xff] %v273
    %290 = vst [vmem:[#allocation8 + $0x40] sm:$0xff] %v274
    %291 = vst [vmem:[#allocation8 + $0x48] sm:$0xff] %v275
    %292 = vst [vmem:[#allocation8 + $0x50] sm:$0xff] %v276
    %293 = vst [vmem:[#allocation8 + $0x58] sm:$0xff] %v277
    %294 = vst [vmem:[#allocation8 + $0x60] sm:$0xff] %v278
    %295 = vst [vmem:[#allocation8 + $0x68] sm:$0xff] %v279
    %296 = vst [vmem:[#allocation8 + $0x70] sm:$0xff] %v280
    %297 = vst [vmem:[#allocation8 + $0x78] sm:$0xff] %v281
    // Predicated region
    $region26: #{tpu_custom_call.1} parent=1 // pred_check
      _
    $region27: #{tpu_custom_call.1} parent=1 // pred_check_branch
      %299 = sbr.rel (0) target = $region29
    $region28: #{tpu_custom_call.1} parent=1 // pred_region
      %s301 = ssub.s32 2048, 2048
      %302 = vsyncadd [#allocation4], %s301
      %s304 = sshll.u32 [#allocation8], 4
      %s305 = int_to_ptr.vmem [resolvable:$true] %s304
      %307 = dma.vmem_to_hbm [thread:$0]  %s305, 2048, %s3, [#allocation4]
    $region29: #{tpu_custom_call.1} parent=1 // pred_fallthru
      _
    // Predicated region
    $region30: #{tpu_custom_call.1} parent=1 // pred_check
      _
    $region31: #{tpu_custom_call.1} parent=1 // pred_check_branch
      %309 = sbr.rel (0) target = $region33
    $region32: #{tpu_custom_call.1} parent=1 // pred_region
      %310 = dma.done [#allocation4], 2048
    $region33: #{tpu_custom_call.1} parent=1 // pred_fallthru
      _
    %311 = vsyncpa [#allocation3], 1
    %312 = vsyncpa [#allocation6], 1
    %313 = vsyncpa [#allocation4], 1

</llo_original>
